<compile_context>
chip_gen: v6e
topology: v6e:2x2x1
jax: 0.10.0
libtpu: 0.0.40
codegen_flags: <defaults>
</compile_context>

<pallas_src>
import math

import jax
import jax.numpy as jnp
from jax.experimental import pallas as pl
from jax.experimental.pallas import tpu as pltpu


_LANE = 128
_EPS = 1e-5
_INV_SQRT2 = 1.0 / math.sqrt(2.0)
_MATMUL_DTYPE = jnp.bfloat16   # MXU operand / intermediate-storage dtype


def _round_up(n, m):
    return ((n + m - 1) // m) * m


def _pick_row_tile(rows):
    # Largest row tile (multiple of 8, capped at 1024 for v5e's 16 MiB scoped
    # VMEM) that still yields >= 2 grid steps, so the software pipeline has
    # work to overlap and v7x's two TensorCores both get tiles via the
    # "parallel" grid axis.  Rows are padded up to a multiple of the tile.
    for cand in (1024, 512, 256, 128, 64, 32, 16, 8):
        if pl.cdiv(rows, cand) >= 2:
            return cand
    return 8


def _erf(x):
    # Abramowitz & Stegun 7.1.26 (|err| < 1.5e-7); the divide is pushed onto
    # the EUP slot with an approximate reciprocal (free next to the exp).
    a1, a2, a3, a4, a5 = (0.254829592, -0.284496736, 1.421413741,
                          -1.453152027, 1.061405429)
    p = 0.3275911
    s = jnp.sign(x)
    ax = jnp.abs(x)
    t = pl.reciprocal(1.0 + p * ax, approx=True)
    poly = ((((a5 * t + a4) * t + a3) * t + a2) * t + a1) * t
    return s * (1.0 - poly * jnp.exp(-ax * ax))


# --------------------- pass 1: conv3x3 (im2col GEMM) + BN partial stats ----- #

def conv3x3_stats_kernel(p_ref, w3_ref, b3_ref, y_ref, s_ref):
    """p_ref : (TM, Cpk) bf16   packed im2col patches for this row tile
       w3_ref: (Cpk, Cp) bf16   folded 3x3 weights (tap-major, zero-padded)
       b3_ref: (1, Cp)   f32    conv bias (zero-padded)
       y_ref : (TM, Cp)  bf16   conv output tile (pre-BN)
       s_ref : (1, 2, Cp) f32   row 0 = sum(y), row 1 = sum(y*y)
    """
    y = jnp.dot(p_ref[...], w3_ref[...], preferred_element_type=jnp.float32)
    y = y + b3_ref[...]
    y_ref[...] = y.astype(y_ref.dtype)
    # One-pass partial statistics for global BatchNorm (computed on f32 y).
    ssum = jnp.sum(y, axis=0, keepdims=True)
    ssq = jnp.sum(y * y, axis=0, keepdims=True)
    s_ref[...] = jnp.concatenate([ssum, ssq], axis=0)[None]


# --------------------- pass 2: BN normalize + GELU + 1x1 GEMM --------------- #

def bn_gelu_proj_kernel(y_ref, scale_ref, shift_ref, w1_ref, b1_ref, o_ref):
    """y_ref    : (TM, Cp) bf16  conv3x3 output tile
       scale_ref: (1, Cp)  f32   gamma * rsqrt(var + eps)
       shift_ref: (1, Cp)  f32   beta - mean * scale
       w1_ref   : (Cp, Kp) bf16  1x1 conv weights (lane-dense, padded)
       b1_ref   : (1, Kp)  f32
       o_ref    : (TM, Kp) bf16  lane-dense output tile
    """
    z = y_ref[...].astype(jnp.float32) * scale_ref[...] + shift_ref[...]  # BN
    g = 0.5 * z * (1.0 + _erf(z * _INV_SQRT2))                            # GELU
    out = jnp.dot(g.astype(_MATMUL_DTYPE), w1_ref[...],
                  preferred_element_type=jnp.float32) + b1_ref[...]
    o_ref[...] = out.astype(o_ref.dtype)


# --------------------------------- wrapper ---------------------------------- #

def conv_head_forward(x_nchw, params):
    """x_nchw: (N, C, H, W) float32 -> (N, K, H, W) float32."""
    N, C, H, W = x_nchw.shape
    K = params["w1"].shape[0]
    Cp = _round_up(C, _LANE)
    Kp = _round_up(K, _LANE)
    Cpk = _round_up(9 * C, _LANE)          # packed im2col contraction width
    R = N * H * W
    TM = _pick_row_tile(R)
    Rp = _round_up(R, TM)
    T = Rp // TM
    n_pad = Rp - R

    # ---- layout prep: NCHW -> NHWC (bf16) -> packed im2col (Rp, Cpk) -------- #
    # (Kept in the wrapper so the kernels see lane/sublane-aligned 2-D slabs.)
    # TODO(synk): an in-kernel halo-read variant (grid over N x H-tiles) would
    # remove this materialized slab entirely; skipped to keep the kernel simple.
    x = jnp.transpose(x_nchw, (0, 2, 3, 1)).astype(_MATMUL_DTYPE)
    xp = jnp.pad(x, ((0, 0), (1, 1), (1, 1), (0, 0)))
    taps = [xp[:, dy:dy + H, dx:dx + W, :] for dy in range(3) for dx in range(3)]
    patches = jnp.concatenate(taps, axis=-1).reshape(R, 9 * C)
    patches = jnp.pad(patches, ((0, n_pad), (0, Cpk - 9 * C)))

    # ---- weight / bias prep (all lane-padded with zeros) -------------------- #
    # (Cout, Cin, 3, 3) -> (3, 3, Cin, Cout) -> (9*C, C) -> (Cpk, Cp)
    w3 = jnp.transpose(params["w3"], (2, 3, 1, 0)).reshape(9 * C, C)
    w3 = jnp.pad(w3, ((0, Cpk - 9 * C), (0, Cp - C))).astype(_MATMUL_DTYPE)
    b3 = jnp.pad(params["b3"], (0, Cp - C)).astype(jnp.float32)
    b3_row = b3.reshape(1, Cp)
    gamma = jnp.pad(params["gamma"], (0, Cp - C)).astype(jnp.float32)
    beta = jnp.pad(params["beta"], (0, Cp - C)).astype(jnp.float32)
    # (K, C, 1, 1) -> (C, K) -> (Cp, Kp)
    w1 = jnp.transpose(params["w1"].reshape(K, C), (1, 0))
    w1 = jnp.pad(w1, ((0, Cp - C), (0, Kp - K))).astype(_MATMUL_DTYPE)
    b1 = jnp.pad(params["b1"], (0, Kp - K)).reshape(1, Kp).astype(jnp.float32)

    # ---- pass 1: conv3x3 + partial BN stats --------------------------------- #
    cost1 = pl.CostEstimate(
        flops=2 * Rp * Cpk * Cp,
        transcendentals=0,
        bytes_accessed=(Rp * Cpk * 2 + Cpk * Cp * 2 + Cp * 4
                        + Rp * Cp * 2 + T * 2 * Cp * 4))
    y, stats = pl.pallas_call(
        conv3x3_stats_kernel,
        out_shape=(jax.ShapeDtypeStruct((Rp, Cp), _MATMUL_DTYPE),
                   jax.ShapeDtypeStruct((T, 2, Cp), jnp.float32)),
        grid_spec=pltpu.PrefetchScalarGridSpec(
            num_scalar_prefetch=0,
            grid=(T,),
            in_specs=[pl.BlockSpec((TM, Cpk), lambda i: (i, 0)),
                      pl.BlockSpec((Cpk, Cp), lambda i: (0, 0)),
                      pl.BlockSpec((1, Cp), lambda i: (0, 0))],
            out_specs=(pl.BlockSpec((TM, Cp), lambda i: (i, 0)),
                       pl.BlockSpec((1, 2, Cp), lambda i: (i, 0, 0)))),
        compiler_params=pltpu.CompilerParams(dimension_semantics=("parallel",)),
        cost_estimate=cost1,
    )(patches, w3, b3_row)

    # ---- global BN statistics ------------------------------------------------ #
    # Padded (all-zero) im2col rows produce y == b3 exactly; subtract their
    # contribution so the batch statistics stay exact over the real N*H*W rows.
    total = jnp.sum(stats, axis=0)                     # (2, Cp)
    sum_y = total[0] - n_pad * b3
    sum_y2 = total[1] - n_pad * (b3 * b3)
    mean = sum_y / R
    var = jnp.maximum(sum_y2 / R - mean * mean, 0.0)   # clamp one-pass cancellation
    inv = jax.lax.rsqrt(var + _EPS)
    scale = (gamma * inv).reshape(1, Cp)
    shift = (beta - mean * gamma * inv).reshape(1, Cp)

    # ---- pass 2: normalize + GELU + 1x1 projection --------------------------- #
    cost2 = pl.CostEstimate(
        flops=2 * Rp * Cp * Kp + 12 * Rp * Cp,
        transcendentals=2 * Rp * Cp,
        bytes_accessed=(Rp * Cp * 2 + 2 * Cp * 4 + Cp * Kp * 2 + Kp * 4
                        + Rp * Kp * 2))
    out = pl.pallas_call(
        bn_gelu_proj_kernel,
        out_shape=jax.ShapeDtypeStruct((Rp, Kp), _MATMUL_DTYPE),
        grid_spec=pltpu.PrefetchScalarGridSpec(
            num_scalar_prefetch=0,
            grid=(T,),
            in_specs=[pl.BlockSpec((TM, Cp), lambda i: (i, 0)),
                      pl.BlockSpec((1, Cp), lambda i: (0, 0)),
                      pl.BlockSpec((1, Cp), lambda i: (0, 0)),
                      pl.BlockSpec((Cp, Kp), lambda i: (0, 0)),
                      pl.BlockSpec((1, Kp), lambda i: (0, 0))],
            out_specs=pl.BlockSpec((TM, Kp), lambda i: (i, 0))),
        compiler_params=pltpu.CompilerParams(dimension_semantics=("parallel",)),
        cost_estimate=cost2,
    )(y, scale, shift, w1, b1)

    out = out[:R, :K].astype(jnp.float32).reshape(N, H, W, K)
    return jnp.transpose(out, (0, 3, 1, 2))


# ----------------------------- pure-JAX reference --------------------------- #

def conv_head_ref(x_nchw, params):
    x = x_nchw.astype(jnp.float32)
    y = jax.lax.conv_general_dilated(
        x, params["w3"], (1, 1), "SAME",
        dimension_numbers=("NCHW", "OIHW", "NCHW"),
        precision=jax.lax.Precision.HIGHEST)
    y = y + params["b3"].reshape(1, -1, 1, 1)
    mean = jnp.mean(y, axis=(0, 2, 3), keepdims=True)
    var = jnp.mean((y - mean) ** 2, axis=(0, 2, 3), keepdims=True)
    y = (y - mean) * jax.lax.rsqrt(var + _EPS)
    y = y * params["gamma"].reshape(1, -1, 1, 1) + params["beta"].reshape(1, -1, 1, 1)
    y = jax.nn.gelu(y, approximate=False)
    out = jax.lax.conv_general_dilated(
        y, params["w1"], (1, 1), "VALID",
        dimension_numbers=("NCHW", "OIHW", "NCHW"),
        precision=jax.lax.Precision.HIGHEST)
    return out + params["b1"].reshape(1, -1, 1, 1)


# ----------------------------------- params --------------------------------- #

def init_params(key, in_channels, num_classes):
    k_w3, k_b3, k_w1, k_b1 = jax.random.split(key, 4)
    C, K = in_channels, num_classes
    w3 = 0.02 * jax.random.truncated_normal(k_w3, -2.0, 2.0, (C, C, 3, 3),
                                            dtype=jnp.float32)
    bnd3 = 1.0 / math.sqrt(C * 9)
    b3 = jax.random.uniform(k_b3, (C,), jnp.float32, -bnd3, bnd3)
    gamma = jnp.ones((C,), jnp.float32)
    beta = jnp.zeros((C,), jnp.float32)
    bnd1 = 1.0 / math.sqrt(C)
    w1 = jax.random.uniform(k_w1, (K, C, 1, 1), jnp.float32, -bnd1, bnd1)
    b1 = 0.02 * jax.random.normal(k_b1, (K,), jnp.float32)
    return {"w3": w3, "b3": b3, "gamma": gamma, "beta": beta,
            "w1": w1, "b1": b1}


# ------------------------------------- main ---------------------------------- #

if __name__ == "__main__":
    key = jax.random.PRNGKey(0)
    k_x, k_p = jax.random.split(key)

    N, C, H, W = 2, 32, 16, 16     # batch, in_channels, spatial
    num_classes = 8

    x = jax.random.normal(k_x, (N, C, H, W), jnp.float32)
    params = init_params(k_p, C, num_classes)

    out = conv_head_forward(x, params)
    out = jax.block_until_ready(out)

    ref = jax.block_until_ready(conv_head_ref(x, params))
    assert out.shape == (N, num_classes, H, W)
    # Tolerance accounts for bf16 MXU operands + bf16 intermediate/output
    # storage (f32 accumulation) vs. the HIGHEST-precision f32 reference.
    assert jnp.allclose(out, ref, atol=4e-2, rtol=4e-2), (
        f"max abs diff {jnp.max(jnp.abs(out - ref))}")

    print("KERNEL_OK")
</pallas_src>

<mosaic_0001>
module attributes {stable_mosaic.version = 11 : i64} {
  func.func @conv3x3_stats_kernel(%arg0: i32, %arg1: memref<256x384xbf16, #tpu.memory_space<vmem>>, %arg2: memref<384x128xbf16, #tpu.memory_space<vmem>>, %arg3: memref<1x128xf32, #tpu.memory_space<vmem>>, %arg4: memref<256x128xbf16, #tpu.memory_space<vmem>>, %arg5: memref<1x2x128xf32, #tpu.memory_space<vmem>>) attributes {dimension_semantics = [#tpu.dimension_semantics<parallel>], iteration_bounds = array<i64: 2>, scalar_prefetch = 0 : i64, scratch_operands = 0 : i64, tpu.core_type = #tpu.core_type<tc>, window_params = [{transform_indices = @transform_0, window_bounds = array<i64: 256, 384>}, {pipeline_mode = #tpu.pipeline_mode<synchronous>, transform_indices = @transform_1, window_bounds = array<i64: 384, 128>}, {pipeline_mode = #tpu.pipeline_mode<synchronous>, transform_indices = @transform_2, window_bounds = array<i64: 1, 128>}, {transform_indices = @transform_3, window_bounds = array<i64: 256, 128>}, {transform_indices = @transform_4, window_bounds = array<i64: 1, 2, 128>}]} {
    %c0 = arith.constant 0 : index
    %c0_0 = arith.constant 0 : index
    %0 = vector.load %arg1[%c0, %c0_0] : memref<256x384xbf16, #tpu.memory_space<vmem>>, vector<256x384xbf16>
    %c0_1 = arith.constant 0 : index
    %c0_2 = arith.constant 0 : index
    %1 = vector.load %arg2[%c0_1, %c0_2] : memref<384x128xbf16, #tpu.memory_space<vmem>>, vector<384x128xbf16>
    %cst = arith.constant dense<0.000000e+00> : vector<256x128xf32>
    %2 = tpu.matmul %0, %1, %cst {dimension_numbers = #tpu.dot_dimension_numbers<[1], [0], [0], [1], [0, 0, 1, 1], [], []>} : vector<256x384xbf16>, vector<384x128xbf16>, vector<256x128xf32> -> vector<256x128xf32>
    %c0_3 = arith.constant 0 : index
    %c0_4 = arith.constant 0 : index
    %3 = vector.load %arg3[%c0_3, %c0_4] : memref<1x128xf32, #tpu.memory_space<vmem>>, vector<1x128xf32>
    %4 = vector.broadcast %3 : vector<1x128xf32> to vector<256x128xf32>
    %5 = arith.addf %2, %4 : vector<256x128xf32>
    %6 = arith.truncf %5 : vector<256x128xf32> to vector<256x128xbf16>
    %c0_5 = arith.constant 0 : index
    %c0_6 = arith.constant 0 : index
    %7 = vector.load %arg4[%c0_5, %c0_6] : memref<256x128xbf16, #tpu.memory_space<vmem>>, vector<256x128xbf16>
    tpu.vector_store %arg4[%c0_5, %c0_6], %6 {strides = array<i32>} : memref<256x128xbf16, #tpu.memory_space<vmem>>, vector<256x128xbf16>,
    %cst_7 = arith.constant dense<0.000000e+00> : vector<128xf32>
    %8 = vector.multi_reduction <add>, %5, %cst_7 [0] : vector<256x128xf32> to vector<128xf32>
    %9 = vector.shape_cast %8 : vector<128xf32> to vector<1x128xf32>
    %10 = arith.mulf %5, %5 : vector<256x128xf32>
    %cst_8 = arith.constant dense<0.000000e+00> : vector<128xf32>
    %11 = vector.multi_reduction <add>, %10, %cst_8 [0] : vector<256x128xf32> to vector<128xf32>
    %12 = vector.shape_cast %11 : vector<128xf32> to vector<1x128xf32>
    %13 = tpu.concatenate %9, %12 in 0 : vector<1x128xf32>, vector<1x128xf32> -> vector<2x128xf32>
    %14 = vector.shape_cast %13 : vector<2x128xf32> to vector<1x2x128xf32>
    %c0_9 = arith.constant 0 : index
    %c0_10 = arith.constant 0 : index
    %c0_11 = arith.constant 0 : index
    %15 = vector.load %arg5[%c0_9, %c0_10, %c0_11] : memref<1x2x128xf32, #tpu.memory_space<vmem>>, vector<1x2x128xf32>
    tpu.vector_store %arg5[%c0_9, %c0_10, %c0_11], %14 {strides = array<i32>} : memref<1x2x128xf32, #tpu.memory_space<vmem>>, vector<1x2x128xf32>,
    return
  }
  func.func @transform_0(%arg0: i32) -> (i32, i32) {
    %c0_i32 = arith.constant 0 : i32
    %c0_i32_0 = arith.constant 0 : i32
    return %arg0, %c0_i32 : i32, i32
  }
  func.func @transform_1(%arg0: i32) -> (i32, i32) {
    %c0_i32 = arith.constant 0 : i32
    %c0_i32_0 = arith.constant 0 : i32
    %c0_i32_1 = arith.constant 0 : i32
    return %c0_i32, %c0_i32_0 : i32, i32
  }
  func.func @transform_2(%arg0: i32) -> (i32, i32) {
    %c0_i32 = arith.constant 0 : i32
    %c0_i32_0 = arith.constant 0 : i32
    %c0_i32_1 = arith.constant 0 : i32
    return %c0_i32, %c0_i32_0 : i32, i32
  }
  func.func @transform_3(%arg0: i32) -> (i32, i32) {
    %c0_i32 = arith.constant 0 : i32
    %c0_i32_0 = arith.constant 0 : i32
    return %arg0, %c0_i32 : i32, i32
  }
  func.func @transform_4(%arg0: i32) -> (i32, i32, i32) {
    %c0_i32 = arith.constant 0 : i32
    %c0_i32_0 = arith.constant 0 : i32
    %c0_i32_1 = arith.constant 0 : i32
    return %arg0, %c0_i32, %c0_i32_0 : i32, i32, i32
  }
}

</mosaic_0001>

<llo_original>
// kernel: tpu_custom_call.1
$region0: #{tpu_custom_call.1}
  #allocation0 [shape = 'u32[]', space=smem, size = 0x4, offset = 0x4, fixed_abs, tag = 'smem constant byte address 0x4 - core index']
  #allocation1 [shape = 'u32[144,128]{1,0:T(1,128)}', space=vmem, size = 0x12000, scoped, tag = 'internal scratch']
  %s0 = inlined_call_operand.hbm [shape: bf16[512,384], index: 0, kind: input, shape index: {}]
  %s1 = inlined_call_operand.hbm [shape: bf16[384,128], index: 1, kind: input, shape index: {}]
  %s2 = inlined_call_operand.vmem [shape: f32[1,128], index: 2, kind: input, shape index: {}]
  %s3 = inlined_call_operand.hbm [shape: bf16[512,128], index: 3, kind: output, shape index: {0}]
  %s4 = inlined_call_operand.hbm [shape: f32[2,2,128], index: 4, kind: output, shape index: {1}]
  %5 = xla_tuple %s3, %s4
  %s6 = sld [smem:[#allocation0]]
  $region61: #{tpu_custom_call.1} parent=0
    _
  %s8 = ssub.s32 1, %s6
  %s9 = scalar_select 0, %s8, %s6
  $region1: #{tpu_custom_call.1} parent=0
    #allocation2 [shape = 'u8[393216]{0}', space=vmem, size = 0x60000, scoped, tag = 'input window, operand 0']
    #allocation3 [shape = 's32[2]{0}', space=sflag, size = 0x8, scoped, tag = 'scoped memory for tpu_custom_call.1']
    #allocation4 [shape = 's32[2]{0}', space=sflag, size = 0x8, scoped, tag = 'scoped memory for tpu_custom_call.1']
    #allocation5 [shape = 'u8[98304]{0}', space=vmem, size = 0x18000, scoped, tag = 'input window, operand 1, single buffered']
    #allocation6 [shape = 's32[1]{0}', space=sflag, size = 0x4, scoped, tag = 'scoped memory for tpu_custom_call.1']
    #allocation7 [shape = 'u8[131072]{0}', space=vmem, size = 0x20000, scoped, tag = 'output window, operand 0']
    #allocation8 [shape = 'u8[2048]{0}', space=vmem, size = 0x800, scoped, tag = 'output window, operand 1']
    #allocation9 [shape = 's32[2]{0}', space=sflag, size = 0x8, scoped, tag = 'scoped memory for tpu_custom_call.1']
    %10 = vsyncpa [#allocation3], 0
    %s11 = scalar_lea.sflag [#allocation3], 1
    %12 = vsyncpa %s11, 0
    %13 = vsyncpa [#allocation6], 0
    %14 = vsyncpa [#allocation4], 0
    %s15 = scalar_lea.sflag [#allocation4], 1
    %16 = vsyncpa %s15, 0
    %17 = vsyncpa [#allocation9], 0
    %s18 = scalar_lea.sflag [#allocation9], 1
    %19 = vsyncpa %s18, 0
    loop: start=0, step=1, limit=4
    $region2: #{tpu_custom_call.1} parent=1 // loop_pre_header
      _
    $region3: #{tpu_custom_call.1} parent=1 // loop_header
      %s21 = sphi 0, %s25
      %p22 = scmp.ge.s32.totalorder %s21, 4
      %s31 = sphi 0, %s33
      %s34 = sphi 0, %s31
      %s35 = sphi 0, %s34
      %s51 = sphi 0, %s35
      %s55 = sphi 0, %s55
      %s57 = sphi 0, %s55
      %s58 = sphi 0, %s57
      %s72 = sphi 0, %s58
      %s76 = sphi 0, %s76
      %s78 = sphi 0, %s76
      %s79 = sphi 0, %s78
      %s93 = sphi 0, %s79
      %s99 = sphi 0, %s101
      %s102 = sphi 0, %s99
      %s103 = sphi 0, %s102
      %s119 = sphi 0, %s103
      %s125 = sphi 0, %s127
      %s128 = sphi 0, %s125
      %s129 = sphi 0, %s128
      %s145 = sphi 0, %s129
    $region4: #{tpu_custom_call.1} parent=1 // loop_header_branch
      %24 = sbr.rel (%p22) target = $region8
    $region5: #{tpu_custom_call.1} parent=1 // loop_body
      %s26 = ssub.s32 %s21, 1
      %s27 = ssub.s32 %s21, 2
      %s28 = sadd.s32 %s21, 1
      %s29 = ssub.s32 %s21, %s28
      %p30 = scmp.eq.s32.totalorder %s29, 0
      %s32 = sadd.s32 %s31, 1
      %s33 = scalar_select %p30, %s31, %s32
      %p36 = pneg %p30
      %p37 = scmp.eq.s32.totalorder %s21, 1
      %p38 = por %p36, %p37
      %p39 = scmp.ne.s32.totalorder %s31, %s34
      %p40 = scmp.eq.s32.totalorder %s21, 0
      %p41 = por %p39, %p40
      %p42 = scmp.ne.s32.totalorder %s31, %s34
      %p43 = scmp.eq.s32.totalorder %s26, 1
      %p44 = por %p42, %p43
      %p45 = scmp.ne.s32.totalorder %s34, %s35
      %p46 = scmp.eq.s32.totalorder %s26, 0
      %p47 = por %p45, %p46
      %p48 = scmp.ne.s32.totalorder %s34, %s35
      %p49 = scmp.eq.s32.totalorder %s27, 1
      %p50 = por %p48, %p49
      %p52 = scmp.ne.s32.totalorder %s35, %s51
      %p53 = scmp.eq.s32.totalorder %s27, 0
      %p54 = por %p52, %p53
      %s56 = sadd.s32 %s55, 1
      %p59 = scmp.eq.s32.totalorder %s21, 1
      %p60 = scmp.ne.s32.totalorder %s55, %s57
      %p61 = scmp.eq.s32.totalorder %s21, 0
      %p62 = por %p60, %p61
      %p63 = scmp.ne.s32.totalorder %s55, %s57
      %p64 = scmp.eq.s32.totalorder %s26, 1
      %p65 = por %p63, %p64
      %p66 = scmp.ne.s32.totalorder %s57, %s58
      %p67 = scmp.eq.s32.totalorder %s26, 0
      %p68 = por %p66, %p67
      %p69 = scmp.ne.s32.totalorder %s57, %s58
      %p70 = scmp.eq.s32.totalorder %s27, 1
      %p71 = por %p69, %p70
      %p73 = scmp.ne.s32.totalorder %s58, %s72
      %p74 = scmp.eq.s32.totalorder %s27, 0
      %p75 = por %p73, %p74
      %s77 = sadd.s32 %s76, 1
      %p80 = scmp.eq.s32.totalorder %s21, 1
      %p81 = scmp.ne.s32.totalorder %s76, %s78
      %p82 = scmp.eq.s32.totalorder %s21, 0
      %p83 = por %p81, %p82
      %p84 = scmp.ne.s32.totalorder %s76, %s78
      %p85 = scmp.eq.s32.totalorder %s26, 1
      %p86 = por %p84, %p85
      %p87 = scmp.ne.s32.totalorder %s78, %s79
      %p88 = scmp.eq.s32.totalorder %s26, 0
      %p89 = por %p87, %p88
      %p90 = scmp.ne.s32.totalorder %s78, %s79
      %p91 = scmp.eq.s32.totalorder %s27, 1
      %p92 = por %p90, %p91
      %p94 = scmp.ne.s32.totalorder %s79, %s93
      %p95 = scmp.eq.s32.totalorder %s27, 0
      %p96 = por %p94, %p95
      %s97 = ssub.s32 %s21, %s28
      %p98 = scmp.eq.s32.totalorder %s97, 0
      %s100 = sadd.s32 %s99, 1
      %s101 = scalar_select %p98, %s99, %s100
      %p104 = pneg %p98
      %p105 = scmp.eq.s32.totalorder %s21, 1
      %p106 = por %p104, %p105
      %p107 = scmp.ne.s32.totalorder %s99, %s102
      %p108 = scmp.eq.s32.totalorder %s21, 0
      %p109 = por %p107, %p108
      %p110 = scmp.ne.s32.totalorder %s99, %s102
      %p111 = scmp.eq.s32.totalorder %s26, 1
      %p112 = por %p110, %p111
      %p113 = scmp.ne.s32.totalorder %s102, %s103
      %p114 = scmp.eq.s32.totalorder %s26, 0
      %p115 = por %p113, %p114
      %p116 = scmp.ne.s32.totalorder %s102, %s103
      %p117 = scmp.eq.s32.totalorder %s27, 1
      %p118 = por %p116, %p117
      %p120 = scmp.ne.s32.totalorder %s103, %s119
      %p121 = scmp.eq.s32.totalorder %s27, 0
      %p122 = por %p120, %p121
      %s123 = ssub.s32 %s21, %s28
      %p124 = scmp.eq.s32.totalorder %s123, 0
      %s126 = sadd.s32 %s125, 1
      %s127 = scalar_select %p124, %s125, %s126
      %p130 = pneg %p124
      %p131 = scmp.eq.s32.totalorder %s21, 1
      %p132 = por %p130, %p131
      %p133 = scmp.ne.s32.totalorder %s125, %s128
      %p134 = scmp.eq.s32.totalorder %s21, 0
      %p135 = por %p133, %p134
      %p136 = scmp.ne.s32.totalorder %s125, %s128
      %p137 = scmp.eq.s32.totalorder %s26, 1
      %p138 = por %p136, %p137
      %p139 = scmp.ne.s32.totalorder %s128, %s129
      %p140 = scmp.eq.s32.totalorder %s26, 0
      %p141 = por %p139, %p140
      %p142 = scmp.ne.s32.totalorder %s128, %s129
      %p143 = scmp.eq.s32.totalorder %s27, 1
      %p144 = por %p142, %p143
      %p146 = scmp.ne.s32.totalorder %s129, %s145
      %p147 = scmp.eq.s32.totalorder %s27, 0
      %p148 = por %p146, %p147
      %p149 = scmp.le.s32.totalorder 1, %s21
      %p150 = scmp.lt.s32.totalorder %s21, 3
      %p151 = pnand %p149, %p150
      %p152 = pneg %p151
      // Predicated region
      $region9: #{tpu_custom_call.1} parent=5 // pred_check
        _
      $region10: #{tpu_custom_call.1} parent=5 // pred_check_branch
        %154 = sbr.rel (%p151) target = $region12
      $region11: #{tpu_custom_call.1} parent=5 // pred_region
        %s155 = ssub.s32 %s21, 1
        // Predicated region
        $region13: #{tpu_custom_call.1} parent=11 // pred_check
          %p156 = pneg %p68
        $region14: #{tpu_custom_call.1} parent=11 // pred_check_branch
          %158 = sbr.rel (%p156) target = $region16
        $region15: #{tpu_custom_call.1} parent=11 // pred_region
          %s160 = ssub.s32 3072, 3072
          %161 = vsyncadd [#allocation6], %s160
          %s162 = sshll.u32 [#allocation5], 4
          %s163 = int_to_ptr.vmem [resolvable:$true] %s162
          %168 = dma.hbm_to_vmem [thread:$0]  %s1, 3072, %s163, [#allocation6], 64, 64, 4
        $region16: #{tpu_custom_call.1} parent=11 // pred_fallthru
          _
        // Predicated region
        $region17: #{tpu_custom_call.1} parent=11 // pred_check
          %p169 = pneg %p89
        $region18: #{tpu_custom_call.1} parent=11 // pred_check_branch
          %171 = sbr.rel (%p169) target = $region20
        $region19: #{tpu_custom_call.1} parent=11 // pred_region
          _
        $region20: #{tpu_custom_call.1} parent=11 // pred_fallthru
          _
      $region12: #{tpu_custom_call.1} parent=5 // pred_fallthru
        _
      %p172 = scmp.lt.s32.totalorder %s21, 2
      // Predicated region
      $region21: #{tpu_custom_call.1} parent=5 // pred_check
        %p173 = pneg %p172
      $region22: #{tpu_custom_call.1} parent=5 // pred_check_branch
        %175 = sbr.rel (%p173) target = $region24
      $region23: #{tpu_custom_call.1} parent=5 // pred_region
        // Predicated region
        $region25: #{tpu_custom_call.1} parent=23 // pred_check
          %p176 = pneg %p41
        $region26: #{tpu_custom_call.1} parent=23 // pred_check_branch
          %178 = sbr.rel (%p176) target = $region28
        $region27: #{tpu_custom_call.1} parent=23 // pred_region
          %s179 = sand.u32 %s31, 1
          %s180 = scalar_lea.sflag [#allocation3], %s179
          %s181 = sand.u32 %s31, 1
          %s182 = smul.addr %s181, 384
          %s183 = scalar_lea.vmem [#allocation2], %s182
          %s184 = smul.u32 32, %s21
          %s186 = ssub.s32 6144, 6144
          %187 = vsyncadd %s180, %s186
          %s188 = smul.addr %s184, 3
          %s189 = smul.addr %s188, 64
          %s190 = scalar_lea.hbm %s0, %s189
          %s191 = sshll.u32 %s183, 4
          %s192 = int_to_ptr.vmem [resolvable:$true] %s191
          %197 = dma.hbm_to_vmem [thread:$0]  %s190, 6144, %s192, %s180, 192, 192, 12
        $region28: #{tpu_custom_call.1} parent=23 // pred_fallthru
          _
      $region24: #{tpu_custom_call.1} parent=5 // pred_fallthru
        _
      %p198 = scmp.le.s32.totalorder 1, %s21
      %p199 = scmp.lt.s32.totalorder %s21, 3
      %p200 = pnand %p198, %p199
      %p201 = pneg %p200
      // Predicated region
      $region29: #{tpu_custom_call.1} parent=5 // pred_check
        _
      $region30: #{tpu_custom_call.1} parent=5 // pred_check_branch
        %203 = sbr.rel (%p200) target = $region32
      $region31: #{tpu_custom_call.1} parent=5 // pred_region
        %s204 = ssub.s32 %s21, 1
        %s205 = sand.u32 %s34, 1
        %s206 = scalar_lea.sflag [#allocation3], %s205
        %s207 = sand.u32 %s34, 1
        %s208 = smul.addr %s207, 384
        %s209 = scalar_lea.vmem [#allocation2], %s208
        // Predicated region
        $region33: #{tpu_custom_call.1} parent=31 // pred_check
          %p210 = pneg %p47
        $region34: #{tpu_custom_call.1} parent=31 // pred_check_branch
          %212 = sbr.rel (%p210) target = $region36
        $region35: #{tpu_custom_call.1} parent=31 // pred_region
          %213 = dma.done %s206, 6144
        $region36: #{tpu_custom_call.1} parent=31 // pred_fallthru
          _
        // Predicated region
        $region37: #{tpu_custom_call.1} parent=31 // pred_check
          %p214 = pneg %p68
        $region38: #{tpu_custom_call.1} parent=31 // pred_check_branch
          %216 = sbr.rel (%p214) target = $region40
        $region39: #{tpu_custom_call.1} parent=31 // pred_region
          %217 = dma.done [#allocation6], 3072
        $region40: #{tpu_custom_call.1} parent=31 // pred_fallthru
          _
        %s218 = sand.u32 %s34, 1
        %s219 = scalar_lea.sflag [#allocation3], %s218
        %s220 = sand.u32 %s34, 1
        %s221 = smul.addr %s220, 384
        %s222 = scalar_lea.vmem [#allocation2], %s221
        %p223 = pneg %p47
        %p224 = pneg %p44
        %p225 = pneg %p68
        %p226 = pneg %p65
        %p227 = pneg %p89
        %p228 = pneg %p86
        %p229 = pneg %p115
        %p230 = pneg %p112
        %s231 = sand.u32 %s102, 1
        %s232 = scalar_lea.sflag [#allocation4], %s231
        %s233 = sand.u32 %s102, 1
        %s234 = smul.addr %s233, 128
        %s235 = scalar_lea.vmem [#allocation7], %s234
        %p236 = pneg %p141
        %p237 = pneg %p138
        %s238 = sand.u32 %s128, 1
        %s239 = scalar_lea.sflag [#allocation9], %s238
        %s240 = sand.u32 %s128, 1
        %s241 = smul.addr %s240, 2
        %s242 = scalar_lea.vmem [#allocation8], %s241
        %s243 = smul.u32 32, %s26
        %s244 = smul.u32 32, %s26
        %v246 = vld [vmem:[%s209] sm:$0xff]
        %v247 = vld [vmem:[%s209 + $0x8] sm:$0xf]
        %v248 = vld [vmem:[%s209 + $0xc] sm:$0xff]
        %v249 = vld [vmem:[%s209 + $0x14] sm:$0xf]
        %v250 = vld [vmem:[%s209 + $0x18] sm:$0xff]
        %v251 = vld [vmem:[%s209 + $0x20] sm:$0xf]
        %v252 = vld [vmem:[%s209 + $0x24] sm:$0xff]
        %v253 = vld [vmem:[%s209 + $0x2c] sm:$0xf]
        %v254 = vld [vmem:[%s209 + $0x30] sm:$0xff]
        %v255 = vld [vmem:[%s209 + $0x38] sm:$0xf]
        %v256 = vld [vmem:[%s209 + $0x3c] sm:$0xff]
        %v257 = vld [vmem:[%s209 + $0x44] sm:$0xf]
        %v258 = vld [vmem:[%s209 + $0x48] sm:$0xff]
        %v259 = vld [vmem:[%s209 + $0x50] sm:$0xf]
        %v260 = vld [vmem:[%s209 + $0x54] sm:$0xff]
        %v261 = vld [vmem:[%s209 + $0x5c] sm:$0xf]
        %v262 = vld [vmem:[%s209 + $0x60] sm:$0xff]
        %v263 = vld [vmem:[%s209 + $0x68] sm:$0xf]
        %v264 = vld [vmem:[%s209 + $0x6c] sm:$0xff]
        %v265 = vld [vmem:[%s209 + $0x74] sm:$0xf]
        %v266 = vld [vmem:[%s209 + $0x78] sm:$0xff]
        %v267 = vld [vmem:[%s209 + $0x80] sm:$0xf]
        %v268 = vld [vmem:[%s209 + $0x84] sm:$0xff]
        %v269 = vld [vmem:[%s209 + $0x8c] sm:$0xf]
        %v270 = vld [vmem:[%s209 + $0x90] sm:$0xff]
        %v271 = vld [vmem:[%s209 + $0x98] sm:$0xf]
        %v272 = vld [vmem:[%s209 + $0x9c] sm:$0xff]
        %v273 = vld [vmem:[%s209 + $0xa4] sm:$0xf]
        %v274 = vld [vmem:[%s209 + $0xa8] sm:$0xff]
        %v275 = vld [vmem:[%s209 + $0xb0] sm:$0xf]
        %v276 = vld [vmem:[%s209 + $0xb4] sm:$0xff]
        %v277 = vld [vmem:[%s209 + $0xbc] sm:$0xf]
        %v278 = vld [vmem:[%s209 + $0xc0] sm:$0xff]
        %v279 = vld [vmem:[%s209 + $0xc8] sm:$0xf]
        %v280 = vld [vmem:[%s209 + $0xcc] sm:$0xff]
        %v281 = vld [vmem:[%s209 + $0xd4] sm:$0xf]
        %v282 = vld [vmem:[%s209 + $0xd8] sm:$0xff]
        %v283 = vld [vmem:[%s209 + $0xe0] sm:$0xf]
        %v284 = vld [vmem:[%s209 + $0xe4] sm:$0xff]
        %v285 = vld [vmem:[%s209 + $0xec] sm:$0xf]
        %v286 = vld [vmem:[%s209 + $0xf0] sm:$0xff]
        %v287 = vld [vmem:[%s209 + $0xf8] sm:$0xf]
        %v288 = vld [vmem:[%s209 + $0xfc] sm:$0xff]
        %v289 = vld [vmem:[%s209 + $0x104] sm:$0xf]
        %v290 = vld [vmem:[%s209 + $0x108] sm:$0xff]
        %v291 = vld [vmem:[%s209 + $0x110] sm:$0xf]
        %v292 = vld [vmem:[%s209 + $0x114] sm:$0xff]
        %v293 = vld [vmem:[%s209 + $0x11c] sm:$0xf]
        %v294 = vld [vmem:[%s209 + $0x120] sm:$0xff]
        %v295 = vld [vmem:[%s209 + $0x128] sm:$0xf]
        %v296 = vld [vmem:[%s209 + $0x12c] sm:$0xff]
        %v297 = vld [vmem:[%s209 + $0x134] sm:$0xf]
        %v298 = vld [vmem:[%s209 + $0x138] sm:$0xff]
        %v299 = vld [vmem:[%s209 + $0x140] sm:$0xf]
        %v300 = vld [vmem:[%s209 + $0x144] sm:$0xff]
        %v301 = vld [vmem:[%s209 + $0x14c] sm:$0xf]
        %v302 = vld [vmem:[%s209 + $0x150] sm:$0xff]
        %v303 = vld [vmem:[%s209 + $0x158] sm:$0xf]
        %v304 = vld [vmem:[%s209 + $0x15c] sm:$0xff]
        %v305 = vld [vmem:[%s209 + $0x164] sm:$0xf]
        %v306 = vld [vmem:[%s209 + $0x168] sm:$0xff]
        %v307 = vld [vmem:[%s209 + $0x170] sm:$0xf]
        %v308 = vld [vmem:[%s209 + $0x174] sm:$0xff]
        %v309 = vld [vmem:[%s209 + $0x17c] sm:$0xf]
        %v310 = vld [vmem:[#allocation5] sm:$0xf]
        %v311 = vld [vmem:[#allocation5 + $0x4] sm:$0xf]
        %v312 = vld [vmem:[#allocation5 + $0x8] sm:$0xf]
        %v313 = vld [vmem:[#allocation5 + $0xc] sm:$0xf]
        %v314 = vld [vmem:[#allocation5 + $0x10] sm:$0xf]
        %v315 = vld [vmem:[#allocation5 + $0x14] sm:$0xf]
        %v316 = vld [vmem:[#allocation5 + $0x18] sm:$0xf]
        %v317 = vld [vmem:[#allocation5 + $0x1c] sm:$0xf]
        %v318 = vld [vmem:[#allocation5 + $0x20] sm:$0xf]
        %v319 = vld [vmem:[#allocation5 + $0x24] sm:$0xf]
        %v320 = vld [vmem:[#allocation5 + $0x28] sm:$0xf]
        %v321 = vld [vmem:[#allocation5 + $0x2c] sm:$0xf]
        %v322 = vld [vmem:[#allocation5 + $0x30] sm:$0xf]
        %v323 = vld [vmem:[#allocation5 + $0x34] sm:$0xf]
        %v324 = vld [vmem:[#allocation5 + $0x38] sm:$0xf]
        %v325 = vld [vmem:[#allocation5 + $0x3c] sm:$0xf]
        %v326 = vld [vmem:[#allocation5 + $0x40] sm:$0xf]
        %v327 = vld [vmem:[#allocation5 + $0x44] sm:$0xf]
        %v328 = vld [vmem:[#allocation5 + $0x48] sm:$0xf]
        %v329 = vld [vmem:[#allocation5 + $0x4c] sm:$0xf]
        %v330 = vld [vmem:[#allocation5 + $0x50] sm:$0xf]
        %v331 = vld [vmem:[#allocation5 + $0x54] sm:$0xf]
        %v332 = vld [vmem:[#allocation5 + $0x58] sm:$0xf]
        %v333 = vld [vmem:[#allocation5 + $0x5c] sm:$0xf]
        %v334 = vld [vmem:[#allocation5 + $0x60] sm:$0xf]
        %v335 = vld [vmem:[#allocation5 + $0x64] sm:$0xf]
        %v336 = vld [vmem:[#allocation5 + $0x68] sm:$0xf]
        %v337 = vld [vmem:[#allocation5 + $0x6c] sm:$0xf]
        %v338 = vld [vmem:[#allocation5 + $0x70] sm:$0xf]
        %v339 = vld [vmem:[#allocation5 + $0x74] sm:$0xf]
        %v340 = vld [vmem:[#allocation5 + $0x78] sm:$0xf]
        %v341 = vld [vmem:[#allocation5 + $0x7c] sm:$0xf]
        %v342 = vld [vmem:[#allocation5 + $0x80] sm:$0xf]
        %v343 = vld [vmem:[#allocation5 + $0x84] sm:$0xf]
        %v344 = vld [vmem:[#allocation5 + $0x88] sm:$0xf]
        %v345 = vld [vmem:[#allocation5 + $0x8c] sm:$0xf]
        %v346 = vld [vmem:[#allocation5 + $0x90] sm:$0xf]
        %v347 = vld [vmem:[#allocation5 + $0x94] sm:$0xf]
        %v348 = vld [vmem:[#allocation5 + $0x98] sm:$0xf]
        %v349 = vld [vmem:[#allocation5 + $0x9c] sm:$0xf]
        %v350 = vld [vmem:[#allocation5 + $0xa0] sm:$0xf]
        %v351 = vld [vmem:[#allocation5 + $0xa4] sm:$0xf]
        %v352 = vld [vmem:[#allocation5 + $0xa8] sm:$0xf]
        %v353 = vld [vmem:[#allocation5 + $0xac] sm:$0xf]
        %v354 = vld [vmem:[#allocation5 + $0xb0] sm:$0xf]
        %v355 = vld [vmem:[#allocation5 + $0xb4] sm:$0xf]
        %v356 = vld [vmem:[#allocation5 + $0xb8] sm:$0xf]
        %v357 = vld [vmem:[#allocation5 + $0xbc] sm:$0xf]
        %v358 = vld [vmem:[%s2] sm:$0x1]
        %v360 = vlaneseq
        %v361 = vshrl.u32 %v360, 7
        %v362 = vsub.s32 0, %v361
        %v363 = vrot.slane %v358, %v362
        %v429 = vunpack.c.l.b16 %v246
        %v430 = vunpack.c.h.b16 %v246
        %v431 = vunpack.c.l.b16 %v247
        %v432 = vunpack.c.l.b16 %v248
        %v433 = vunpack.c.h.b16 %v248
        %v434 = vunpack.c.l.b16 %v249
        %v435 = vunpack.c.l.b16 %v250
        %v436 = vunpack.c.h.b16 %v250
        %v437 = vunpack.c.l.b16 %v251
        %v438 = vunpack.c.l.b16 %v252
        %v439 = vunpack.c.h.b16 %v252
        %v440 = vunpack.c.l.b16 %v253
        %v441 = vunpack.c.l.b16 %v254
        %v442 = vunpack.c.h.b16 %v254
        %v443 = vunpack.c.l.b16 %v255
        %v444 = vunpack.c.l.b16 %v256
        %v445 = vunpack.c.h.b16 %v256
        %v446 = vunpack.c.l.b16 %v257
        %v447 = vunpack.c.l.b16 %v258
        %v448 = vunpack.c.h.b16 %v258
        %v449 = vunpack.c.l.b16 %v259
        %v450 = vunpack.c.l.b16 %v260
        %v451 = vunpack.c.h.b16 %v260
        %v452 = vunpack.c.l.b16 %v261
        %v453 = vunpack.c.l.b16 %v262
        %v454 = vunpack.c.h.b16 %v262
        %v455 = vunpack.c.l.b16 %v263
        %v456 = vunpack.c.l.b16 %v264
        %v457 = vunpack.c.h.b16 %v264
        %v458 = vunpack.c.l.b16 %v265
        %v459 = vunpack.c.l.b16 %v266
        %v460 = vunpack.c.h.b16 %v266
        %v461 = vunpack.c.l.b16 %v267
        %v462 = vunpack.c.l.b16 %v268
        %v463 = vunpack.c.h.b16 %v268
        %v464 = vunpack.c.l.b16 %v269
        %v465 = vunpack.c.l.b16 %v270
        %v466 = vunpack.c.h.b16 %v270
        %v467 = vunpack.c.l.b16 %v271
        %v468 = vunpack.c.l.b16 %v272
        %v469 = vunpack.c.h.b16 %v272
        %v470 = vunpack.c.l.b16 %v273
        %v471 = vunpack.c.l.b16 %v274
        %v472 = vunpack.c.h.b16 %v274
        %v473 = vunpack.c.l.b16 %v275
        %v474 = vunpack.c.l.b16 %v276
        %v475 = vunpack.c.h.b16 %v276
        %v476 = vunpack.c.l.b16 %v277
        %v477 = vunpack.c.l.b16 %v278
        %v478 = vunpack.c.h.b16 %v278
        %v479 = vunpack.c.l.b16 %v279
        %v480 = vunpack.c.l.b16 %v280
        %v481 = vunpack.c.h.b16 %v280
        %v482 = vunpack.c.l.b16 %v281
        %v483 = vunpack.c.l.b16 %v282
        %v484 = vunpack.c.h.b16 %v282
        %v485 = vunpack.c.l.b16 %v283
        %v486 = vunpack.c.l.b16 %v284
        %v487 = vunpack.c.h.b16 %v284
        %v488 = vunpack.c.l.b16 %v285
        %v489 = vunpack.c.l.b16 %v286
        %v490 = vunpack.c.h.b16 %v286
        %v491 = vunpack.c.l.b16 %v287
        %v492 = vunpack.c.l.b16 %v288
        %v493 = vunpack.c.h.b16 %v288
        %v494 = vunpack.c.l.b16 %v289
        %v495 = vunpack.c.l.b16 %v290
        %v496 = vunpack.c.h.b16 %v290
        %v497 = vunpack.c.l.b16 %v291
        %v498 = vunpack.c.l.b16 %v292
        %v499 = vunpack.c.h.b16 %v292
        %v500 = vunpack.c.l.b16 %v293
        %v501 = vunpack.c.l.b16 %v294
        %v502 = vunpack.c.h.b16 %v294
        %v503 = vunpack.c.l.b16 %v295
        %v504 = vunpack.c.l.b16 %v296
        %v505 = vunpack.c.h.b16 %v296
        %v506 = vunpack.c.l.b16 %v297
        %v507 = vunpack.c.l.b16 %v298
        %v508 = vunpack.c.h.b16 %v298
        %v509 = vunpack.c.l.b16 %v299
        %v510 = vunpack.c.l.b16 %v300
        %v511 = vunpack.c.h.b16 %v300
        %v512 = vunpack.c.l.b16 %v301
        %v513 = vunpack.c.l.b16 %v302
        %v514 = vunpack.c.h.b16 %v302
        %v515 = vunpack.c.l.b16 %v303
        %v516 = vunpack.c.l.b16 %v304
        %v517 = vunpack.c.h.b16 %v304
        %v518 = vunpack.c.l.b16 %v305
        %v519 = vunpack.c.l.b16 %v306
        %v520 = vunpack.c.h.b16 %v306
        %v521 = vunpack.c.l.b16 %v307
        %v522 = vunpack.c.l.b16 %v308
        %v523 = vunpack.c.h.b16 %v308
        %v524 = vunpack.c.l.b16 %v309
        %v525 = vpack.c.b16 %v432, %v429
        %v526 = vpack.c.b16 %v433, %v430
        %v527 = vpack.c.b16 %v434, %v431
        %v528 = vpack.c.b16 %v438, %v435
        %v529 = vpack.c.b16 %v439, %v436
        %v530 = vpack.c.b16 %v440, %v437
        %v531 = vpack.c.b16 %v444, %v441
        %v532 = vpack.c.b16 %v445, %v442
        %v533 = vpack.c.b16 %v446, %v443
        %v534 = vpack.c.b16 %v450, %v447
        %v535 = vpack.c.b16 %v451, %v448
        %v536 = vpack.c.b16 %v452, %v449
        %v537 = vpack.c.b16 %v456, %v453
        %v538 = vpack.c.b16 %v457, %v454
        %v539 = vpack.c.b16 %v458, %v455
        %v540 = vpack.c.b16 %v462, %v459
        %v541 = vpack.c.b16 %v463, %v460
        %v542 = vpack.c.b16 %v464, %v461
        %v543 = vpack.c.b16 %v468, %v465
        %v544 = vpack.c.b16 %v469, %v466
        %v545 = vpack.c.b16 %v470, %v467
        %v546 = vpack.c.b16 %v474, %v471
        %v547 = vpack.c.b16 %v475, %v472
        %v548 = vpack.c.b16 %v476, %v473
        %v549 = vpack.c.b16 %v480, %v477
        %v550 = vpack.c.b16 %v481, %v478
        %v551 = vpack.c.b16 %v482, %v479
        %v552 = vpack.c.b16 %v486, %v483
        %v553 = vpack.c.b16 %v487, %v484
        %v554 = vpack.c.b16 %v488, %v485
        %v555 = vpack.c.b16 %v492, %v489
        %v556 = vpack.c.b16 %v493, %v490
        %v557 = vpack.c.b16 %v494, %v491
        %v558 = vpack.c.b16 %v498, %v495
        %v559 = vpack.c.b16 %v499, %v496
        %v560 = vpack.c.b16 %v500, %v497
        %v561 = vpack.c.b16 %v504, %v501
        %v562 = vpack.c.b16 %v505, %v502
        %v563 = vpack.c.b16 %v506, %v503
        %v564 = vpack.c.b16 %v510, %v507
        %v565 = vpack.c.b16 %v511, %v508
        %v566 = vpack.c.b16 %v512, %v509
        %v567 = vpack.c.b16 %v516, %v513
        %v568 = vpack.c.b16 %v517, %v514
        %v569 = vpack.c.b16 %v518, %v515
        %v570 = vpack.c.b16 %v522, %v519
        %v571 = vpack.c.b16 %v523, %v520
        %v572 = vpack.c.b16 %v524, %v521
        %v669 = vunpack.c.l.b16 %v310
        %v670 = vunpack.c.l.b16 %v311
        %v671 = vunpack.c.l.b16 %v312
        %v672 = vunpack.c.l.b16 %v313
        %v673 = vunpack.c.l.b16 %v314
        %v674 = vunpack.c.l.b16 %v315
        %v675 = vunpack.c.l.b16 %v316
        %v676 = vunpack.c.l.b16 %v317
        %v677 = vunpack.c.l.b16 %v318
        %v678 = vunpack.c.l.b16 %v319
        %v679 = vunpack.c.l.b16 %v320
        %v680 = vunpack.c.l.b16 %v321
        %v681 = vunpack.c.l.b16 %v322
        %v682 = vunpack.c.l.b16 %v323
        %v683 = vunpack.c.l.b16 %v324
        %v684 = vunpack.c.l.b16 %v325
        %v685 = vunpack.c.l.b16 %v326
        %v686 = vunpack.c.l.b16 %v327
        %v687 = vunpack.c.l.b16 %v328
        %v688 = vunpack.c.l.b16 %v329
        %v689 = vunpack.c.l.b16 %v330
        %v690 = vunpack.c.l.b16 %v331
        %v691 = vunpack.c.l.b16 %v332
        %v692 = vunpack.c.l.b16 %v333
        %v693 = vunpack.c.l.b16 %v334
        %v694 = vunpack.c.l.b16 %v335
        %v695 = vunpack.c.l.b16 %v336
        %v696 = vunpack.c.l.b16 %v337
        %v697 = vunpack.c.l.b16 %v338
        %v698 = vunpack.c.l.b16 %v339
        %v699 = vunpack.c.l.b16 %v340
        %v700 = vunpack.c.l.b16 %v341
        %v701 = vunpack.c.l.b16 %v342
        %v702 = vunpack.c.l.b16 %v343
        %v703 = vunpack.c.l.b16 %v344
        %v704 = vunpack.c.l.b16 %v345
        %v705 = vunpack.c.l.b16 %v346
        %v706 = vunpack.c.l.b16 %v347
        %v707 = vunpack.c.l.b16 %v348
        %v708 = vunpack.c.l.b16 %v349
        %v709 = vunpack.c.l.b16 %v350
        %v710 = vunpack.c.l.b16 %v351
        %v711 = vunpack.c.l.b16 %v352
        %v712 = vunpack.c.l.b16 %v353
        %v713 = vunpack.c.l.b16 %v354
        %v714 = vunpack.c.l.b16 %v355
        %v715 = vunpack.c.l.b16 %v356
        %v716 = vunpack.c.l.b16 %v357
        %v717 = vpack.c.b16 %v670, %v669
        %v718 = vpack.c.b16 %v672, %v671
        %v719 = vpack.c.b16 %v674, %v673
        %v720 = vpack.c.b16 %v676, %v675
        %v721 = vpack.c.b16 %v678, %v677
        %v722 = vpack.c.b16 %v680, %v679
        %v723 = vpack.c.b16 %v682, %v681
        %v724 = vpack.c.b16 %v684, %v683
        %v725 = vpack.c.b16 %v686, %v685
        %v726 = vpack.c.b16 %v688, %v687
        %v727 = vpack.c.b16 %v690, %v689
        %v728 = vpack.c.b16 %v692, %v691
        %v729 = vpack.c.b16 %v694, %v693
        %v730 = vpack.c.b16 %v696, %v695
        %v731 = vpack.c.b16 %v698, %v697
        %v732 = vpack.c.b16 %v700, %v699
        %v733 = vpack.c.b16 %v702, %v701
        %v734 = vpack.c.b16 %v704, %v703
        %v735 = vpack.c.b16 %v706, %v705
        %v736 = vpack.c.b16 %v708, %v707
        %v737 = vpack.c.b16 %v710, %v709
        %v738 = vpack.c.b16 %v712, %v711
        %v739 = vpack.c.b16 %v714, %v713
        %v740 = vpack.c.b16 %v716, %v715
        %765 = vmatprep.subr.bf16.mxu0 0
        %766 = vmatpush1.bf16.msra.mxu0 %v724
        %767 = vmatprep.subr.bf16.mxu0 0
        %768 = vmatpush1.bf16.msra.mxu0 %v723
        %769 = vmatprep.subr.bf16.mxu0 0
        %770 = vmatpush1.bf16.msra.mxu0 %v722
        %771 = vmatprep.subr.bf16.mxu0 0
        %772 = vmatpush1.bf16.msra.mxu0 %v721
        %773 = vmatprep.subr.bf16.mxu0 0
        %774 = vmatpush1.bf16.msra.mxu0 %v720
        %775 = vmatprep.subr.bf16.mxu0 0
        %776 = vmatpush1.bf16.msra.mxu0 %v719
        %777 = vmatprep.subr.bf16.mxu0 0
        %778 = vmatpush1.bf16.msra.mxu0 %v718
        %779 = vmatprep.subr.bf16.mxu0 0
        %780 = vmatpush1.bf16.msra.mxu0 %v717
        %781 = vmatprep.subr.bf16.mxu0 0
        %782 = vmatpush2.bf16.msra.mxu0 %v732
        %783 = vmatprep.subr.bf16.mxu0 0
        %784 = vmatpush2.bf16.msra.mxu0 %v731
        %785 = vmatprep.subr.bf16.mxu0 0
        %786 = vmatpush2.bf16.msra.mxu0 %v730
        %787 = vmatprep.subr.bf16.mxu0 0
        %788 = vmatpush2.bf16.msra.mxu0 %v729
        %789 = vmatprep.subr.bf16.mxu0 0
        %790 = vmatpush2.bf16.msra.mxu0 %v728
        %791 = vmatprep.subr.bf16.mxu0 0
        %792 = vmatpush2.bf16.msra.mxu0 %v727
        %793 = vmatprep.subr.bf16.mxu0 0
        %794 = vmatpush2.bf16.msra.mxu0 %v726
        %795 = vmatprep.subr.bf16.mxu0 0
        %796 = vmatpush2.bf16.msra.mxu0 %v725
        %797 = vmatprep.mubr.bf16.mxu0 %v526
        %798 = vmatmul.mubr.bf16.gmra.mxu0 %v525
        %v799 = vpop.f32.mrf.mxu0
        %v800 = vadd.f32 %v363, %v799
        %v801 = vpop.f32.mrf.mxu0
        %v802 = vpop.f32.mrf.mxu0
        %v803 = vadd.f32 %v363, %v802
        %v804 = vpop.f32.mrf.mxu0
        %805 = vmatprep.mubr.bf16.mxu0 %v529
        %806 = vmatmul.mubr.bf16.gmra.mxu0 %v528
        %v807 = vpop.f32.mrf.mxu0
        %v808 = vadd.f32 %v363, %v807
        %v809 = vpop.f32.mrf.mxu0
        %v810 = vpop.f32.mrf.mxu0
        %v811 = vadd.f32 %v363, %v810
        %v812 = vpop.f32.mrf.mxu0
        %813 = vmatprep.mubr.bf16.mxu0 %v532
        %814 = vmatmul.mubr.bf16.gmra.mxu0 %v531
        %v815 = vpop.f32.mrf.mxu0
        %v816 = vadd.f32 %v363, %v815
        %v817 = vpop.f32.mrf.mxu0
        %v818 = vpop.f32.mrf.mxu0
        %v819 = vadd.f32 %v363, %v818
        %v820 = vpop.f32.mrf.mxu0
        %821 = vmatprep.mubr.bf16.mxu0 %v535
        %822 = vmatmul.mubr.bf16.gmra.mxu0 %v534
        %v823 = vpop.f32.mrf.mxu0
        %v824 = vadd.f32 %v363, %v823
        %v825 = vpop.f32.mrf.mxu0
        %v826 = vpop.f32.mrf.mxu0
        %v827 = vadd.f32 %v363, %v826
        %v828 = vpop.f32.mrf.mxu0
        %829 = vmatprep.mubr.bf16.mxu0 %v538
        %830 = vmatmul.mubr.bf16.gmra.mxu0 %v537
        %v831 = vpop.f32.mrf.mxu0
        %v832 = vadd.f32 %v363, %v831
        %v833 = vpop.f32.mrf.mxu0
        %v834 = vpop.f32.mrf.mxu0
        %v835 = vadd.f32 %v363, %v834
        %v836 = vpop.f32.mrf.mxu0
        %837 = vmatprep.mubr.bf16.mxu0 %v541
        %838 = vmatmul.mubr.bf16.gmra.mxu0 %v540
        %v839 = vpop.f32.mrf.mxu0
        %v840 = vadd.f32 %v363, %v839
        %v841 = vpop.f32.mrf.mxu0
        %v842 = vpop.f32.mrf.mxu0
        %v843 = vadd.f32 %v363, %v842
        %v844 = vpop.f32.mrf.mxu0
        %845 = vmatprep.mubr.bf16.mxu0 %v544
        %846 = vmatmul.mubr.bf16.gmra.mxu0 %v543
        %v847 = vpop.f32.mrf.mxu0
        %v848 = vadd.f32 %v363, %v847
        %v849 = vpop.f32.mrf.mxu0
        %v850 = vpop.f32.mrf.mxu0
        %v851 = vadd.f32 %v363, %v850
        %v852 = vpop.f32.mrf.mxu0
        %853 = vmatprep.mubr.bf16.mxu0 %v547
        %854 = vmatmul.mubr.bf16.gmra.mxu0 %v546
        %v855 = vpop.f32.mrf.mxu0
        %v856 = vadd.f32 %v363, %v855
        %v857 = vpop.f32.mrf.mxu0
        %v858 = vpop.f32.mrf.mxu0
        %v859 = vadd.f32 %v363, %v858
        %v860 = vpop.f32.mrf.mxu0
        %861 = vmatprep.mubr.bf16.mxu0 %v550
        %862 = vmatmul.mubr.bf16.gmra.mxu0 %v549
        %v863 = vpop.f32.mrf.mxu0
        %v864 = vadd.f32 %v363, %v863
        %v865 = vpop.f32.mrf.mxu0
        %v866 = vpop.f32.mrf.mxu0
        %v867 = vadd.f32 %v363, %v866
        %v868 = vpop.f32.mrf.mxu0
        %869 = vmatprep.mubr.bf16.mxu0 %v553
        %870 = vmatmul.mubr.bf16.gmra.mxu0 %v552
        %v871 = vpop.f32.mrf.mxu0
        %v872 = vadd.f32 %v363, %v871
        %v873 = vpop.f32.mrf.mxu0
        %v874 = vpop.f32.mrf.mxu0
        %v875 = vadd.f32 %v363, %v874
        %v876 = vpop.f32.mrf.mxu0
        %877 = vmatprep.mubr.bf16.mxu0 %v556
        %878 = vmatmul.mubr.bf16.gmra.mxu0 %v555
        %v879 = vpop.f32.mrf.mxu0
        %v880 = vadd.f32 %v363, %v879
        %v881 = vpop.f32.mrf.mxu0
        %v882 = vpop.f32.mrf.mxu0
        %v883 = vadd.f32 %v363, %v882
        %v884 = vpop.f32.mrf.mxu0
        %885 = vmatprep.mubr.bf16.mxu0 %v559
        %886 = vmatmul.mubr.bf16.gmra.mxu0 %v558
        %v887 = vpop.f32.mrf.mxu0
        %v888 = vadd.f32 %v363, %v887
        %v889 = vpop.f32.mrf.mxu0
        %v890 = vpop.f32.mrf.mxu0
        %v891 = vadd.f32 %v363, %v890
        %v892 = vpop.f32.mrf.mxu0
        %893 = vmatprep.mubr.bf16.mxu0 %v562
        %894 = vmatmul.mubr.bf16.gmra.mxu0 %v561
        %v895 = vpop.f32.mrf.mxu0
        %v896 = vadd.f32 %v363, %v895
        %v897 = vpop.f32.mrf.mxu0
        %v898 = vpop.f32.mrf.mxu0
        %v899 = vadd.f32 %v363, %v898
        %v900 = vpop.f32.mrf.mxu0
        %901 = vmatprep.mubr.bf16.mxu0 %v565
        %902 = vmatmul.mubr.bf16.gmra.mxu0 %v564
        %v903 = vpop.f32.mrf.mxu0
        %v904 = vadd.f32 %v363, %v903
        %v905 = vpop.f32.mrf.mxu0
        %v906 = vpop.f32.mrf.mxu0
        %v907 = vadd.f32 %v363, %v906
        %v908 = vpop.f32.mrf.mxu0
        %909 = vmatprep.mubr.bf16.mxu0 %v568
        %910 = vmatmul.mubr.bf16.gmra.mxu0 %v567
        %v911 = vpop.f32.mrf.mxu0
        %v912 = vadd.f32 %v363, %v911
        %v913 = vpop.f32.mrf.mxu0
        %v914 = vpop.f32.mrf.mxu0
        %v915 = vadd.f32 %v363, %v914
        %v916 = vpop.f32.mrf.mxu0
        %917 = vmatprep.mubr.bf16.mxu0 %v571
        %918 = vmatmul.mubr.bf16.gmra.mxu0 %v570
        %v919 = vpop.f32.mrf.mxu0
        %v920 = vadd.f32 %v363, %v919
        %v921 = vpop.f32.mrf.mxu0
        %v922 = vpop.f32.mrf.mxu0
        %v923 = vadd.f32 %v363, %v922
        %v924 = vpop.f32.mrf.mxu0
        %925 = vdwg.mxu0
        %926 = vmatprep.subr.bf16.mxu0 0
        %927 = vmatpush1.bf16.msra.mxu0 %v740
        %928 = vmatprep.subr.bf16.mxu0 0
        %929 = vmatpush1.bf16.msra.mxu0 %v739
        %930 = vmatprep.subr.bf16.mxu0 0
        %931 = vmatpush1.bf16.msra.mxu0 %v738
        %932 = vmatprep.subr.bf16.mxu0 0
        %933 = vmatpush1.bf16.msra.mxu0 %v737
        %934 = vmatprep.subr.bf16.mxu0 0
        %935 = vmatpush1.bf16.msra.mxu0 %v736
        %936 = vmatprep.subr.bf16.mxu0 0
        %937 = vmatpush1.bf16.msra.mxu0 %v735
        %938 = vmatprep.subr.bf16.mxu0 0
        %939 = vmatpush1.bf16.msra.mxu0 %v734
        %940 = vmatprep.subr.bf16.mxu0 0
        %941 = vmatpush1.bf16.msra.mxu0 %v733
        %942 = vmatprep.subr.bf16.mxu0 0
        %943 = vmatpush2.bf16.msra.mxu0 0
        %944 = vmatprep.subr.bf16.mxu0 0
        %945 = vmatpush2.bf16.msra.mxu0 0
        %946 = vmatprep.subr.bf16.mxu0 0
        %947 = vmatpush2.bf16.msra.mxu0 0
        %948 = vmatprep.subr.bf16.mxu0 0
        %949 = vmatpush2.bf16.msra.mxu0 0
        %950 = vmatprep.subr.bf16.mxu0 0
        %951 = vmatpush2.bf16.msra.mxu0 0
        %952 = vmatprep.subr.bf16.mxu0 0
        %953 = vmatpush2.bf16.msra.mxu0 0
        %954 = vmatprep.subr.bf16.mxu0 0
        %955 = vmatpush2.bf16.msra.mxu0 0
        %956 = vmatprep.subr.bf16.mxu0 0
        %957 = vmatpush2.bf16.msra.mxu0 0
        %958 = vmatprep.mubr.bf16.mxu0 0
        %959 = vmatmul.mubr.bf16.gmra.mxu0 %v527
        %v960 = vpop.f32.mrf.mxu0
        %v961 = vadd.f32 %v800, %v960
        %v962 = vpop.f32.mrf.mxu0
        %v963 = vpop.f32.mrf.mxu0
        %v964 = vadd.f32 %v803, %v963
        %v965 = vpop.f32.mrf.mxu0
        %966 = vmatprep.mubr.bf16.mxu0 0
        %967 = vmatmul.mubr.bf16.gmra.mxu0 %v530
        %v968 = vpop.f32.mrf.mxu0
        %v969 = vadd.f32 %v808, %v968
        %v970 = vpop.f32.mrf.mxu0
        %v971 = vpop.f32.mrf.mxu0
        %v972 = vadd.f32 %v811, %v971
        %v973 = vpop.f32.mrf.mxu0
        %974 = vmatprep.mubr.bf16.mxu0 0
        %975 = vmatmul.mubr.bf16.gmra.mxu0 %v533
        %v976 = vpop.f32.mrf.mxu0
        %v977 = vadd.f32 %v816, %v976
        %v978 = vpop.f32.mrf.mxu0
        %v979 = vpop.f32.mrf.mxu0
        %v980 = vadd.f32 %v819, %v979
        %v981 = vpop.f32.mrf.mxu0
        %982 = vmatprep.mubr.bf16.mxu0 0
        %983 = vmatmul.mubr.bf16.gmra.mxu0 %v536
        %v984 = vpop.f32.mrf.mxu0
        %v985 = vadd.f32 %v824, %v984
        %v986 = vpop.f32.mrf.mxu0
        %v987 = vpop.f32.mrf.mxu0
        %v988 = vadd.f32 %v827, %v987
        %v989 = vpop.f32.mrf.mxu0
        %990 = vmatprep.mubr.bf16.mxu0 0
        %991 = vmatmul.mubr.bf16.gmra.mxu0 %v539
        %v992 = vpop.f32.mrf.mxu0
        %v993 = vadd.f32 %v832, %v992
        %v994 = vpop.f32.mrf.mxu0
        %v995 = vpop.f32.mrf.mxu0
        %v996 = vadd.f32 %v835, %v995
        %v997 = vpop.f32.mrf.mxu0
        %998 = vmatprep.mubr.bf16.mxu0 0
        %999 = vmatmul.mubr.bf16.gmra.mxu0 %v542
        %v1000 = vpop.f32.mrf.mxu0
        %v1001 = vadd.f32 %v840, %v1000
        %v1002 = vpop.f32.mrf.mxu0
        %v1003 = vpop.f32.mrf.mxu0
        %v1004 = vadd.f32 %v843, %v1003
        %v1005 = vpop.f32.mrf.mxu0
        %1006 = vmatprep.mubr.bf16.mxu0 0
        %1007 = vmatmul.mubr.bf16.gmra.mxu0 %v545
        %v1008 = vpop.f32.mrf.mxu0
        %v1009 = vadd.f32 %v848, %v1008
        %v1010 = vpop.f32.mrf.mxu0
        %v1011 = vpop.f32.mrf.mxu0
        %v1012 = vadd.f32 %v851, %v1011
        %v1013 = vpop.f32.mrf.mxu0
        %1014 = vmatprep.mubr.bf16.mxu0 0
        %1015 = vmatmul.mubr.bf16.gmra.mxu0 %v548
        %v1016 = vpop.f32.mrf.mxu0
        %v1017 = vadd.f32 %v856, %v1016
        %v1018 = vpop.f32.mrf.mxu0
        %v1019 = vpop.f32.mrf.mxu0
        %v1020 = vadd.f32 %v859, %v1019
        %v1021 = vpop.f32.mrf.mxu0
        %1022 = vmatprep.mubr.bf16.mxu0 0
        %1023 = vmatmul.mubr.bf16.gmra.mxu0 %v551
        %v1024 = vpop.f32.mrf.mxu0
        %v1025 = vadd.f32 %v864, %v1024
        %v1026 = vpop.f32.mrf.mxu0
        %v1027 = vpop.f32.mrf.mxu0
        %v1028 = vadd.f32 %v867, %v1027
        %v1029 = vpop.f32.mrf.mxu0
        %1030 = vmatprep.mubr.bf16.mxu0 0
        %1031 = vmatmul.mubr.bf16.gmra.mxu0 %v554
        %v1032 = vpop.f32.mrf.mxu0
        %v1033 = vadd.f32 %v872, %v1032
        %v1034 = vpop.f32.mrf.mxu0
        %v1035 = vpop.f32.mrf.mxu0
        %v1036 = vadd.f32 %v875, %v1035
        %v1037 = vpop.f32.mrf.mxu0
        %1038 = vmatprep.mubr.bf16.mxu0 0
        %1039 = vmatmul.mubr.bf16.gmra.mxu0 %v557
        %v1040 = vpop.f32.mrf.mxu0
        %v1041 = vadd.f32 %v880, %v1040
        %v1042 = vpop.f32.mrf.mxu0
        %v1043 = vpop.f32.mrf.mxu0
        %v1044 = vadd.f32 %v883, %v1043
        %v1045 = vpop.f32.mrf.mxu0
        %1046 = vmatprep.mubr.bf16.mxu0 0
        %1047 = vmatmul.mubr.bf16.gmra.mxu0 %v560
        %v1048 = vpop.f32.mrf.mxu0
        %v1049 = vadd.f32 %v888, %v1048
        %v1050 = vpop.f32.mrf.mxu0
        %v1051 = vpop.f32.mrf.mxu0
        %v1052 = vadd.f32 %v891, %v1051
        %v1053 = vpop.f32.mrf.mxu0
        %1054 = vmatprep.mubr.bf16.mxu0 0
        %1055 = vmatmul.mubr.bf16.gmra.mxu0 %v563
        %v1056 = vpop.f32.mrf.mxu0
        %v1057 = vadd.f32 %v896, %v1056
        %v1058 = vpop.f32.mrf.mxu0
        %v1059 = vpop.f32.mrf.mxu0
        %v1060 = vadd.f32 %v899, %v1059
        %v1061 = vpop.f32.mrf.mxu0
        %1062 = vmatprep.mubr.bf16.mxu0 0
        %1063 = vmatmul.mubr.bf16.gmra.mxu0 %v566
        %v1064 = vpop.f32.mrf.mxu0
        %v1065 = vadd.f32 %v904, %v1064
        %v1066 = vpop.f32.mrf.mxu0
        %v1067 = vpop.f32.mrf.mxu0
        %v1068 = vadd.f32 %v907, %v1067
        %v1069 = vpop.f32.mrf.mxu0
        %1070 = vmatprep.mubr.bf16.mxu0 0
        %1071 = vmatmul.mubr.bf16.gmra.mxu0 %v569
        %v1072 = vpop.f32.mrf.mxu0
        %v1073 = vadd.f32 %v912, %v1072
        %v1074 = vpop.f32.mrf.mxu0
        %v1075 = vpop.f32.mrf.mxu0
        %v1076 = vadd.f32 %v915, %v1075
        %v1077 = vpop.f32.mrf.mxu0
        %1078 = vmatprep.mubr.bf16.mxu0 0
        %1079 = vmatmul.mubr.bf16.gmra.mxu0 %v572
        %v1080 = vpop.f32.mrf.mxu0
        %v1081 = vadd.f32 %v920, %v1080
        %v1082 = vpop.f32.mrf.mxu0
        %v1083 = vpop.f32.mrf.mxu0
        %v1084 = vadd.f32 %v923, %v1083
        %v1085 = vpop.f32.mrf.mxu0
        %1086 = vdwg.mxu0
        %v1087 = vpack.c.bf16 %v964, %v961
        %v1088 = vpack.c.bf16 %v972, %v969
        %v1089 = vpack.c.bf16 %v980, %v977
        %v1090 = vpack.c.bf16 %v988, %v985
        %v1091 = vpack.c.bf16 %v996, %v993
        %v1092 = vpack.c.bf16 %v1004, %v1001
        %v1093 = vpack.c.bf16 %v1012, %v1009
        %v1094 = vpack.c.bf16 %v1020, %v1017
        %v1095 = vpack.c.bf16 %v1028, %v1025
        %v1096 = vpack.c.bf16 %v1036, %v1033
        %v1097 = vpack.c.bf16 %v1044, %v1041
        %v1098 = vpack.c.bf16 %v1052, %v1049
        %v1099 = vpack.c.bf16 %v1060, %v1057
        %v1100 = vpack.c.bf16 %v1068, %v1065
        %v1101 = vpack.c.bf16 %v1076, %v1073
        %v1102 = vpack.c.bf16 %v1084, %v1081
        %v1119 = vunpack.c.l.b16 %v1087
        %v1120 = vunpack.c.h.b16 %v1087
        %v1121 = vunpack.c.l.b16 %v1088
        %v1122 = vunpack.c.h.b16 %v1088
        %v1123 = vunpack.c.l.b16 %v1089
        %v1124 = vunpack.c.h.b16 %v1089
        %v1125 = vunpack.c.l.b16 %v1090
        %v1126 = vunpack.c.h.b16 %v1090
        %v1127 = vunpack.c.l.b16 %v1091
        %v1128 = vunpack.c.h.b16 %v1091
        %v1129 = vunpack.c.l.b16 %v1092
        %v1130 = vunpack.c.h.b16 %v1092
        %v1131 = vunpack.c.l.b16 %v1093
        %v1132 = vunpack.c.h.b16 %v1093
        %v1133 = vunpack.c.l.b16 %v1094
        %v1134 = vunpack.c.h.b16 %v1094
        %v1135 = vunpack.c.l.b16 %v1095
        %v1136 = vunpack.c.h.b16 %v1095
        %v1137 = vunpack.c.l.b16 %v1096
        %v1138 = vunpack.c.h.b16 %v1096
        %v1139 = vunpack.c.l.b16 %v1097
        %v1140 = vunpack.c.h.b16 %v1097
        %v1141 = vunpack.c.l.b16 %v1098
        %v1142 = vunpack.c.h.b16 %v1098
        %v1143 = vunpack.c.l.b16 %v1099
        %v1144 = vunpack.c.h.b16 %v1099
        %v1145 = vunpack.c.l.b16 %v1100
        %v1146 = vunpack.c.h.b16 %v1100
        %v1147 = vunpack.c.l.b16 %v1101
        %v1148 = vunpack.c.h.b16 %v1101
        %v1149 = vunpack.c.l.b16 %v1102
        %v1150 = vunpack.c.h.b16 %v1102
        %v1151 = vpack.c.b16 %v1119, %v1119
        %v1152 = vpack.c.b16 %v1120, %v1120
        %v1153 = vpack.c.b16 %v1121, %v1121
        %v1154 = vpack.c.b16 %v1122, %v1122
        %v1155 = vpack.c.b16 %v1123, %v1123
        %v1156 = vpack.c.b16 %v1124, %v1124
        %v1157 = vpack.c.b16 %v1125, %v1125
        %v1158 = vpack.c.b16 %v1126, %v1126
        %v1159 = vpack.c.b16 %v1127, %v1127
        %v1160 = vpack.c.b16 %v1128, %v1128
        %v1161 = vpack.c.b16 %v1129, %v1129
        %v1162 = vpack.c.b16 %v1130, %v1130
        %v1163 = vpack.c.b16 %v1131, %v1131
        %v1164 = vpack.c.b16 %v1132, %v1132
        %v1165 = vpack.c.b16 %v1133, %v1133
        %v1166 = vpack.c.b16 %v1134, %v1134
        %v1167 = vpack.c.b16 %v1135, %v1135
        %v1168 = vpack.c.b16 %v1136, %v1136
        %v1169 = vpack.c.b16 %v1137, %v1137
        %v1170 = vpack.c.b16 %v1138, %v1138
        %v1171 = vpack.c.b16 %v1139, %v1139
        %v1172 = vpack.c.b16 %v1140, %v1140
        %v1173 = vpack.c.b16 %v1141, %v1141
        %v1174 = vpack.c.b16 %v1142, %v1142
        %v1175 = vpack.c.b16 %v1143, %v1143
        %v1176 = vpack.c.b16 %v1144, %v1144
        %v1177 = vpack.c.b16 %v1145, %v1145
        %v1178 = vpack.c.b16 %v1146, %v1146
        %v1179 = vpack.c.b16 %v1147, %v1147
        %v1180 = vpack.c.b16 %v1148, %v1148
        %v1181 = vpack.c.b16 %v1149, %v1149
        %v1182 = vpack.c.b16 %v1150, %v1150
        %1215 = vst [vmem:[%s235] sm:$0xf] %v1151
        %1216 = vst [vmem:[%s235 + $0x4] sm:$0xf] %v1152
        %1217 = vst [vmem:[%s235 + $0x8] sm:$0xf] %v1153
        %1218 = vst [vmem:[%s235 + $0xc] sm:$0xf] %v1154
        %1219 = vst [vmem:[%s235 + $0x10] sm:$0xf] %v1155
        %1220 = vst [vmem:[%s235 + $0x14] sm:$0xf] %v1156
        %1221 = vst [vmem:[%s235 + $0x18] sm:$0xf] %v1157
        %1222 = vst [vmem:[%s235 + $0x1c] sm:$0xf] %v1158
        %1223 = vst [vmem:[%s235 + $0x20] sm:$0xf] %v1159
        %1224 = vst [vmem:[%s235 + $0x24] sm:$0xf] %v1160
        %1225 = vst [vmem:[%s235 + $0x28] sm:$0xf] %v1161
        %1226 = vst [vmem:[%s235 + $0x2c] sm:$0xf] %v1162
        %1227 = vst [vmem:[%s235 + $0x30] sm:$0xf] %v1163
        %1228 = vst [vmem:[%s235 + $0x34] sm:$0xf] %v1164
        %1229 = vst [vmem:[%s235 + $0x38] sm:$0xf] %v1165
        %1230 = vst [vmem:[%s235 + $0x3c] sm:$0xf] %v1166
        %1231 = vst [vmem:[%s235 + $0x40] sm:$0xf] %v1167
        %1232 = vst [vmem:[%s235 + $0x44] sm:$0xf] %v1168
        %1233 = vst [vmem:[%s235 + $0x48] sm:$0xf] %v1169
        %1234 = vst [vmem:[%s235 + $0x4c] sm:$0xf] %v1170
        %1235 = vst [vmem:[%s235 + $0x50] sm:$0xf] %v1171
        %1236 = vst [vmem:[%s235 + $0x54] sm:$0xf] %v1172
        %1237 = vst [vmem:[%s235 + $0x58] sm:$0xf] %v1173
        %1238 = vst [vmem:[%s235 + $0x5c] sm:$0xf] %v1174
        %1239 = vst [vmem:[%s235 + $0x60] sm:$0xf] %v1175
        %1240 = vst [vmem:[%s235 + $0x64] sm:$0xf] %v1176
        %1241 = vst [vmem:[%s235 + $0x68] sm:$0xf] %v1177
        %1242 = vst [vmem:[%s235 + $0x6c] sm:$0xf] %v1178
        %1243 = vst [vmem:[%s235 + $0x70] sm:$0xf] %v1179
        %1244 = vst [vmem:[%s235 + $0x74] sm:$0xf] %v1180
        %1245 = vst [vmem:[%s235 + $0x78] sm:$0xf] %v1181
        %1246 = vst [vmem:[%s235 + $0x7c] sm:$0xf] %v1182
        %v1247 = vadd.f32 %v961, %v964
        %v1248 = vadd.f32 %v1247, %v969
        %v1249 = vadd.f32 %v1248, %v972
        %v1250 = vadd.f32 %v1249, %v977
        %v1251 = vadd.f32 %v1250, %v980
        %v1252 = vadd.f32 %v1251, %v985
        %v1253 = vadd.f32 %v1252, %v988
        %v1254 = vadd.f32 %v1253, %v993
        %v1255 = vadd.f32 %v1254, %v996
        %v1256 = vadd.f32 %v1255, %v1001
        %v1257 = vadd.f32 %v1256, %v1004
        %v1258 = vadd.f32 %v1257, %v1009
        %v1259 = vadd.f32 %v1258, %v1012
        %v1260 = vadd.f32 %v1259, %v1017
        %v1261 = vadd.f32 %v1260, %v1020
        %v1262 = vadd.f32 %v1261, %v1025
        %v1263 = vadd.f32 %v1262, %v1028
        %v1264 = vadd.f32 %v1263, %v1033
        %v1265 = vadd.f32 %v1264, %v1036
        %v1266 = vadd.f32 %v1265, %v1041
        %v1267 = vadd.f32 %v1266, %v1044
        %v1268 = vadd.f32 %v1267, %v1049
        %v1269 = vadd.f32 %v1268, %v1052
        %v1270 = vadd.f32 %v1269, %v1057
        %v1271 = vadd.f32 %v1270, %v1060
        %v1272 = vadd.f32 %v1271, %v1065
        %v1273 = vadd.f32 %v1272, %v1068
        %v1274 = vadd.f32 %v1273, %v1073
        %v1275 = vadd.f32 %v1274, %v1076
        %v1276 = vadd.f32 %v1275, %v1081
        %v1277 = vadd.f32 %v1276, %v1084
        %v1278 = vrot.slane %v1277, 4
        %v1279 = vadd.f32 %v1277, %v1278
        %v1280 = vrot.slane %v1279, 2
        %v1281 = vadd.f32 %v1279, %v1280
        %v1282 = vrot.slane %v1281, 1
        %v1283 = vadd.f32 %v1281, %v1282
        %v1284 = vmul.f32 %v961, %v961
        %v1285 = vmul.f32 %v964, %v964
        %v1286 = vmul.f32 %v969, %v969
        %v1287 = vmul.f32 %v972, %v972
        %v1288 = vmul.f32 %v977, %v977
        %v1289 = vmul.f32 %v980, %v980
        %v1290 = vmul.f32 %v985, %v985
        %v1291 = vmul.f32 %v988, %v988
        %v1292 = vmul.f32 %v993, %v993
        %v1293 = vmul.f32 %v996, %v996
        %v1294 = vmul.f32 %v1001, %v1001
        %v1295 = vmul.f32 %v1004, %v1004
        %v1296 = vmul.f32 %v1009, %v1009
        %v1297 = vmul.f32 %v1012, %v1012
        %v1298 = vmul.f32 %v1017, %v1017
        %v1299 = vmul.f32 %v1020, %v1020
        %v1300 = vmul.f32 %v1025, %v1025
        %v1301 = vmul.f32 %v1028, %v1028
        %v1302 = vmul.f32 %v1033, %v1033
        %v1303 = vmul.f32 %v1036, %v1036
        %v1304 = vmul.f32 %v1041, %v1041
        %v1305 = vmul.f32 %v1044, %v1044
        %v1306 = vmul.f32 %v1049, %v1049
        %v1307 = vmul.f32 %v1052, %v1052
        %v1308 = vmul.f32 %v1057, %v1057
        %v1309 = vmul.f32 %v1060, %v1060
        %v1310 = vmul.f32 %v1065, %v1065
        %v1311 = vmul.f32 %v1068, %v1068
        %v1312 = vmul.f32 %v1073, %v1073
        %v1313 = vmul.f32 %v1076, %v1076
        %v1314 = vmul.f32 %v1081, %v1081
        %v1315 = vmul.f32 %v1084, %v1084
        %v1316 = vadd.f32 %v1284, %v1285
        %v1317 = vadd.f32 %v1316, %v1286
        %v1318 = vadd.f32 %v1317, %v1287
        %v1319 = vadd.f32 %v1318, %v1288
        %v1320 = vadd.f32 %v1319, %v1289
        %v1321 = vadd.f32 %v1320, %v1290
        %v1322 = vadd.f32 %v1321, %v1291
        %v1323 = vadd.f32 %v1322, %v1292
        %v1324 = vadd.f32 %v1323, %v1293
        %v1325 = vadd.f32 %v1324, %v1294
        %v1326 = vadd.f32 %v1325, %v1295
        %v1327 = vadd.f32 %v1326, %v1296
        %v1328 = vadd.f32 %v1327, %v1297
        %v1329 = vadd.f32 %v1328, %v1298
        %v1330 = vadd.f32 %v1329, %v1299
        %v1331 = vadd.f32 %v1330, %v1300
        %v1332 = vadd.f32 %v1331, %v1301
        %v1333 = vadd.f32 %v1332, %v1302
        %v1334 = vadd.f32 %v1333, %v1303
        %v1335 = vadd.f32 %v1334, %v1304
        %v1336 = vadd.f32 %v1335, %v1305
        %v1337 = vadd.f32 %v1336, %v1306
        %v1338 = vadd.f32 %v1337, %v1307
        %v1339 = vadd.f32 %v1338, %v1308
        %v1340 = vadd.f32 %v1339, %v1309
        %v1341 = vadd.f32 %v1340, %v1310
        %v1342 = vadd.f32 %v1341, %v1311
        %v1343 = vadd.f32 %v1342, %v1312
        %v1344 = vadd.f32 %v1343, %v1313
        %v1345 = vadd.f32 %v1344, %v1314
        %v1346 = vadd.f32 %v1345, %v1315
        %v1347 = vrot.slane %v1346, 4
        %v1348 = vadd.f32 %v1346, %v1347
        %v1349 = vrot.slane %v1348, 2
        %v1350 = vadd.f32 %v1348, %v1349
        %v1351 = vrot.slane %v1350, 1
        %v1352 = vadd.f32 %v1350, %v1351
        %vm1353 = vcmask 1040384
        %v1354 = vsel %vm1353, %v1283, %v1352
        %1355 = vst [vmem:[%s242] sm:$0x3] %v1354
        %s1356 = sand.u32 %s102, 1
        %s1357 = scalar_lea.sflag [#allocation4], %s1356
        %s1358 = sand.u32 %s102, 1
        %s1359 = smul.addr %s1358, 128
        %s1360 = scalar_lea.vmem [#allocation7], %s1359
        %s1361 = sand.u32 %s128, 1
        %s1362 = scalar_lea.sflag [#allocation9], %s1361
        %s1363 = sand.u32 %s128, 1
        %s1364 = smul.addr %s1363, 2
        %s1365 = scalar_lea.vmem [#allocation8], %s1364
        // Predicated region
        $region41: #{tpu_custom_call.1} parent=31 // pred_check
          %p1366 = pneg %p112
        $region42: #{tpu_custom_call.1} parent=31 // pred_check_branch
          %1368 = sbr.rel (%p1366) target = $region44
        $region43: #{tpu_custom_call.1} parent=31 // pred_region
          %s1369 = smul.u32 32, %s26
          %s1371 = ssub.s32 2048, 2048
          %1372 = vsyncadd %s1357, %s1371
          %s1373 = smul.addr %s1369, 64
          %s1374 = scalar_lea.hbm %s3, %s1373
          %s1375 = sshll.u32 %s1360, 4
          %s1376 = int_to_ptr.vmem [resolvable:$true] %s1375
          %1381 = dma.vmem_to_hbm [thread:$0]  %s1376, 2048, %s1374, %s1357, 64, 64, 4
        $region44: #{tpu_custom_call.1} parent=31 // pred_fallthru
          _
        // Predicated region
        $region45: #{tpu_custom_call.1} parent=31 // pred_check
          %p1382 = pneg %p138
        $region46: #{tpu_custom_call.1} parent=31 // pred_check_branch
          %1384 = sbr.rel (%p1382) target = $region48
        $region47: #{tpu_custom_call.1} parent=31 // pred_region
          %s1386 = ssub.s32 32, 32
          %1387 = vsyncadd %s1362, %s1386
          %s1388 = smul.addr %s26, 32
          %s1389 = scalar_lea.hbm %s4, %s1388
          %s1391 = sshll.u32 %s1365, 4
          %s1392 = int_to_ptr.vmem [resolvable:$true] %s1391
          %1394 = dma.vmem_to_hbm [thread:$0]  %s1392, 32, %s1389, %s1362
        $region48: #{tpu_custom_call.1} parent=31 // pred_fallthru
          _
      $region32: #{tpu_custom_call.1} parent=5 // pred_fallthru
        _
      %p1395 = scmp.le.s32.totalorder 2, %s21
      // Predicated region
      $region49: #{tpu_custom_call.1} parent=5 // pred_check
        %p1396 = pneg %p1395
      $region50: #{tpu_custom_call.1} parent=5 // pred_check_branch
        %1398 = sbr.rel (%p1396) target = $region52
      $region51: #{tpu_custom_call.1} parent=5 // pred_region
        %s1399 = ssub.s32 %s21, 2
        // Predicated region
        $region53: #{tpu_custom_call.1} parent=51 // pred_check
          %p1400 = pneg %p118
        $region54: #{tpu_custom_call.1} parent=51 // pred_check_branch
          %1402 = sbr.rel (%p1400) target = $region56
        $region55: #{tpu_custom_call.1} parent=51 // pred_region
          %s1403 = sand.u32 %s103, 1
          %s1404 = scalar_lea.sflag [#allocation4], %s1403
          %s1405 = sand.u32 %s103, 1
          %s1406 = smul.addr %s1405, 128
          %s1407 = scalar_lea.vmem [#allocation7], %s1406
          %1408 = dma.done %s1404, 2048
        $region56: #{tpu_custom_call.1} parent=51 // pred_fallthru
          _
        // Predicated region
        $region57: #{tpu_custom_call.1} parent=51 // pred_check
          %p1409 = pneg %p144
        $region58: #{tpu_custom_call.1} parent=51 // pred_check_branch
          %1411 = sbr.rel (%p1409) target = $region60
        $region59: #{tpu_custom_call.1} parent=51 // pred_region
          %s1412 = sand.u32 %s129, 1
          %s1413 = scalar_lea.sflag [#allocation9], %s1412
          %s1414 = sand.u32 %s129, 1
          %s1415 = smul.addr %s1414, 2
          %s1416 = scalar_lea.vmem [#allocation8], %s1415
          %1417 = dma.done %s1413, 32
        $region60: #{tpu_custom_call.1} parent=51 // pred_fallthru
          _
      $region52: #{tpu_custom_call.1} parent=5 // pred_fallthru
        _
    $region6: #{tpu_custom_call.1} parent=1 // loop_footer
      %s25 = sadd.s32 1, %s21
    $region7: #{tpu_custom_call.1} parent=1 // loop_footer_branch
      %20 = sbr.rel target = $region3
    $region8: #{tpu_custom_call.1} parent=1 // loop_exit
      _
    %1418 = vsyncpa [#allocation3], 1
    %s1419 = scalar_lea.sflag [#allocation3], 1
    %1420 = vsyncpa %s1419, 1
    %1421 = vsyncpa [#allocation6], 1
    %1422 = vsyncpa [#allocation4], 1
    %s1423 = scalar_lea.sflag [#allocation4], 1
    %1424 = vsyncpa %s1423, 1
    %1425 = vsyncpa [#allocation9], 1
    %s1426 = scalar_lea.sflag [#allocation9], 1
    %1427 = vsyncpa %s1426, 1

</llo_original>
